<compile_context>
chip_gen: v7x
topology: tpu7x:2x2x1
jax: 0.10.0
libtpu: 0.0.40
codegen_flags: <defaults>
</compile_context>

<pallas_src>
import functools

import jax
import jax.numpy as jnp
from jax.experimental import pallas as pl
from jax.experimental.pallas import tpu as pltpu

_LANE = 128
_SUBLANE = 8
_NEG_INF = -1e30                          # finite "-inf" for padded action lanes

_MAX_BATCH_TILE = 2048                    # cap on rows per grid step
_MIN_SPLIT_ROWS = 256                     # split batch across >=2 tiles past this
_PIPELINE_VMEM_BUDGET = 40 * 2**20        # bytes available when sizing the tile
_WEIGHT_SINGLE_BUFFER_BYTES = 4 * 2**20   # single-buffer resident weights past this
_VMEM_LIMIT_FLOOR = 32 * 2**20
_VMEM_LIMIT_CAP = 96 * 2**20


def _round_up(x, m):
    return (x + m - 1) // m * m


def actor_kernel(x_ref, w1_ref, b1_ref, w2_ref, b2_ref, w3_ref, b3_ref, out_ref):
    """Fused 3-layer MLP + log_softmax on one (TB, din_p) batch tile.

    x_ref   : (TB, din_p)     bf16  zero-padded activations
    w*_ref  : per-layer padded bf16 weights (zero padding)
    b*_ref  : (1, N_p)        f32   biases; b3 padded lanes hold -1e30
    out_ref : (TB, act_p)     f32   log-probs (padded lanes sliced off outside)
    """
    x = x_ref[...]
    mxu_dtype = x.dtype

    # fc1 + ReLU   (bf16 MXU dot, f32 accumulate / elementwise)
    h1 = jnp.dot(x, w1_ref[...], preferred_element_type=jnp.float32) + b1_ref[...]
    h1 = jnp.maximum(h1, 0.0)

    # fc2 + ReLU
    h2 = jnp.dot(h1.astype(mxu_dtype), w2_ref[...],
                 preferred_element_type=jnp.float32) + b2_ref[...]
    h2 = jnp.maximum(h2, 0.0)

    # fc3 + numerically stable log_softmax.  Padded action lanes carry -1e30
    # from b3, so exp(.) underflows to exactly 0 in f32 and the normalizer
    # only sees real lanes.
    logits = jnp.dot(h2.astype(mxu_dtype), w3_ref[...],
                     preferred_element_type=jnp.float32) + b3_ref[...]
    m = jnp.max(logits, axis=-1, keepdims=True)
    z = logits - m
    lse = jnp.log(jnp.sum(jnp.exp(z), axis=-1, keepdims=True))
    out_ref[...] = (z - lse).astype(out_ref.dtype)    # full-lane unmasked store


def pack_params(params, mxu_dtype=jnp.bfloat16):
    """Pad each layer to its own lane multiple and cast weights to the MXU dtype.

    Call ONCE outside the per-step path and reuse the result (re-packing every
    forward was the dominant wall-clock cost at small batch sizes).
    """
    w1, b1, w2, b2, w3, b3 = params
    din, hid = w1.shape
    act = w3.shape[1]
    din_p = _round_up(din, _LANE)
    hid_p = _round_up(hid, _LANE)
    act_p = _round_up(act, _LANE)

    def pad_w(w, rows, cols):
        return (jnp.zeros((rows, cols), jnp.float32)
                .at[: w.shape[0], : w.shape[1]].set(w).astype(mxu_dtype))

    def pad_b(bias, cols, fill):
        return (jnp.full((1, cols), fill, jnp.float32)
                .at[0, : bias.shape[-1]].set(bias.reshape(-1)))

    packed = {
        "w1": pad_w(w1, din_p, hid_p), "b1": pad_b(b1, hid_p, 0.0),
        "w2": pad_w(w2, hid_p, hid_p), "b2": pad_b(b2, hid_p, 0.0),
        "w3": pad_w(w3, hid_p, act_p), "b3": pad_b(b3, act_p, _NEG_INF),
    }
    dims = {"din": din, "act": act, "din_p": din_p, "hid_p": hid_p, "act_p": act_p}
    return packed, dims


def _choose_batch_tiling(batch, tb_cap):
    """Pick (tile_rows, num_tiles).

    Small batches -> one sublane-aligned tile (deep M for the MXU).  Larger
    batches -> an even number of tiles (balanced across v7x's 2 TensorCores)
    with tile ~ ceil(batch/n), so padding never approaches a full extra tile.
    """
    b8 = _round_up(max(batch, 1), _SUBLANE)
    if b8 <= tb_cap and b8 < _MIN_SPLIT_ROWS:
        return b8, 1
    n = max(2, pl.cdiv(b8, tb_cap))
    if n % 2:
        n += 1
    tb = min(tb_cap, _round_up(pl.cdiv(b8, n), _SUBLANE))
    return tb, n


def actor_forward(x, packed, dims, *, mxu_dtype=jnp.bfloat16, out_dtype=jnp.float32):
    din, act = dims["din"], dims["act"]
    din_p, hid_p, act_p = dims["din_p"], dims["hid_p"], dims["act_p"]
    batch = x.shape[0]
    mxu_bytes = jnp.dtype(mxu_dtype).itemsize
    out_bytes = jnp.dtype(out_dtype).itemsize

    # --- VMEM accounting -> batch tile size ----------------------------------
    w_copy = (din_p * hid_p + hid_p * hid_p + hid_p * act_p) * mxu_bytes
    single_buffer_weights = w_copy > _WEIGHT_SINGLE_BUFFER_BYTES
    n_wbuf = 1 if single_buffer_weights else 2
    b_copy = (2 * hid_p + act_p) * 4 * _SUBLANE          # sublane-padded f32 biases
    resident = (w_copy + b_copy) * n_wbuf
    per_row = (2 * din_p * mxu_bytes                     # double-buffered input tile
               + 2 * act_p * out_bytes                   # double-buffered output tile
               + (2 * hid_p + 2 * act_p) * 4)            # f32 intermediates (generous)
    rows_budget = max(_SUBLANE, (_PIPELINE_VMEM_BUDGET - resident) // per_row)
    tb_cap = max(_SUBLANE, min(_MAX_BATCH_TILE, (rows_budget // _SUBLANE) * _SUBLANE))

    tb, n_tiles = _choose_batch_tiling(batch, tb_cap)
    b_pad = tb * n_tiles

    footprint = resident + per_row * tb
    vmem_limit = int(max(_VMEM_LIMIT_FLOOR,
                         min(_VMEM_LIMIT_CAP, footprint + 8 * 2**20)))

    # --- pad + cast activations (the only per-call prep left) ----------------
    x_p = (jnp.zeros((b_pad, din_p), mxu_dtype)
           .at[:batch, :din].set(x.astype(mxu_dtype)))

    # Weights/biases have constant index maps -> stay resident across tiles.
    # Past the threshold, drop their (useless) double buffer so large actors
    # still fit v7x's 64 MiB VMEM; tiny actors keep the default path.
    w_mode = {"pipeline_mode": pl.Buffered(1)} if single_buffer_weights else {}

    in_specs = [
        pl.BlockSpec((tb, din_p), lambda i: (i, 0)),               # activations
        pl.BlockSpec((din_p, hid_p), lambda i: (0, 0), **w_mode),  # W1
        pl.BlockSpec((1, hid_p), lambda i: (0, 0), **w_mode),      # b1
        pl.BlockSpec((hid_p, hid_p), lambda i: (0, 0), **w_mode),  # W2
        pl.BlockSpec((1, hid_p), lambda i: (0, 0), **w_mode),      # b2
        pl.BlockSpec((hid_p, act_p), lambda i: (0, 0), **w_mode),  # W3
        pl.BlockSpec((1, act_p), lambda i: (0, 0), **w_mode),      # b3
    ]

    out_p = pl.pallas_call(
        actor_kernel,
        out_shape=jax.ShapeDtypeStruct((b_pad, act_p), out_dtype),
        grid=(n_tiles,),
        in_specs=in_specs,
        out_specs=pl.BlockSpec((tb, act_p), lambda i: (i, 0)),     # lane-dense
        compiler_params=pltpu.CompilerParams(
            dimension_semantics=("parallel",),
            vmem_limit_bytes=vmem_limit,
        ),
    )(x_p, packed["w1"], packed["b1"], packed["w2"], packed["b2"],
      packed["w3"], packed["b3"])

    return out_p[:batch, :act]


def init_linear(key, in_features, out_features):
    # Mimic nn.Linear's default init: U(-1/sqrt(fan_in), 1/sqrt(fan_in)).
    kw, kb = jax.random.split(key)
    bound = 1.0 / (in_features ** 0.5)
    w = jax.random.uniform(kw, (in_features, out_features), jnp.float32,
                           minval=-bound, maxval=bound)
    b = jax.random.uniform(kb, (1, out_features), jnp.float32,
                           minval=-bound, maxval=bound)
    return w, b


def reference_forward(x, params, mxu_dtype=jnp.float32):
    """Pure-JAX reference. mxu_dtype mirrors the kernel's dot-operand dtype."""
    w1, b1, w2, b2, w3, b3 = params

    def dot(a, w):
        return jnp.dot(a.astype(mxu_dtype), w.astype(mxu_dtype),
                       preferred_element_type=jnp.float32)

    h1 = jnp.maximum(dot(x, w1) + b1, 0.0)
    h2 = jnp.maximum(dot(h1, w2) + b2, 0.0)
    logits = dot(h2, w3) + b3
    return jax.nn.log_softmax(logits, axis=-1)


if __name__ == "__main__":
    input_size, hidden_size, action_size = 16, 32, 8

    key = jax.random.PRNGKey(0)
    kx_small, kx_big, k1, k2, k3 = jax.random.split(key, 5)

    w1, b1 = init_linear(k1, input_size, hidden_size)
    w2, b2 = init_linear(k2, hidden_size, hidden_size)
    w3, b3 = init_linear(k3, hidden_size, action_size)
    params = (w1, b1, w2, b2, w3, b3)

    # Pack / pad the parameters ONCE, outside the per-call path.
    packed, dims = pack_params(params)
    fwd = jax.jit(functools.partial(actor_forward, dims=dims))

    def check(batch, key_x):
        x = jax.random.normal(key_x, (batch, input_size), jnp.float32)
        out = jax.block_until_ready(fwd(x, packed))
        assert out.shape == (batch, action_size)
        # Strict check against a reference with identical bf16-MXU numerics.
        ref_bf16 = reference_forward(x, params, mxu_dtype=jnp.bfloat16)
        assert jnp.allclose(out, ref_bf16, atol=1e-4, rtol=1e-4)
        # Looser semantic check vs the pure-f32 PyTorch-equivalent forward.
        ref_f32 = reference_forward(x, params, mxu_dtype=jnp.float32)
        assert jnp.allclose(out, ref_f32, atol=5e-2, rtol=5e-2)
        # log-probabilities must normalize.
        assert jnp.allclose(jnp.sum(jnp.exp(out), axis=-1), 1.0, atol=1e-3)

    check(2, kx_small)    # tiny batch: single 8-row tile, grid=(1,)
    check(300, kx_big)    # medium batch: 2 balanced "parallel" tiles (152 rows)
    print("KERNEL_OK")
</pallas_src>

<mosaic_0001>
module attributes {stable_mosaic.version = 11 : i64} {
  func.func @actor_kernel(%arg0: i32, %arg1: memref<8x128xbf16, #tpu.memory_space<vmem>>, %arg2: memref<128x128xbf16, #tpu.memory_space<vmem>>, %arg3: memref<1x128xf32, #tpu.memory_space<vmem>>, %arg4: memref<128x128xbf16, #tpu.memory_space<vmem>>, %arg5: memref<1x128xf32, #tpu.memory_space<vmem>>, %arg6: memref<128x128xbf16, #tpu.memory_space<vmem>>, %arg7: memref<1x128xf32, #tpu.memory_space<vmem>>, %arg8: memref<8x128xf32, #tpu.memory_space<vmem>>) attributes {dimension_semantics = [#tpu.dimension_semantics<parallel>], iteration_bounds = array<i64: 1>, scalar_prefetch = 0 : i64, scratch_operands = 0 : i64, tpu.core_type = #tpu.core_type<tc>, window_params = [{transform_indices = @transform_0, window_bounds = array<i64: 8, 128>}, {pipeline_mode = #tpu.pipeline_mode<synchronous>, transform_indices = @transform_1, window_bounds = array<i64: 128, 128>}, {pipeline_mode = #tpu.pipeline_mode<synchronous>, transform_indices = @transform_2, window_bounds = array<i64: 1, 128>}, {pipeline_mode = #tpu.pipeline_mode<synchronous>, transform_indices = @transform_3, window_bounds = array<i64: 128, 128>}, {pipeline_mode = #tpu.pipeline_mode<synchronous>, transform_indices = @transform_4, window_bounds = array<i64: 1, 128>}, {pipeline_mode = #tpu.pipeline_mode<synchronous>, transform_indices = @transform_5, window_bounds = array<i64: 128, 128>}, {pipeline_mode = #tpu.pipeline_mode<synchronous>, transform_indices = @transform_6, window_bounds = array<i64: 1, 128>}, {transform_indices = @transform_7, window_bounds = array<i64: 8, 128>}]} {
    %c0 = arith.constant 0 : index
    %c0_0 = arith.constant 0 : index
    %0 = vector.load %arg1[%c0, %c0_0] : memref<8x128xbf16, #tpu.memory_space<vmem>>, vector<8x128xbf16>
    %c0_1 = arith.constant 0 : index
    %c0_2 = arith.constant 0 : index
    %1 = vector.load %arg2[%c0_1, %c0_2] : memref<128x128xbf16, #tpu.memory_space<vmem>>, vector<128x128xbf16>
    %cst = arith.constant dense<0.000000e+00> : vector<8x128xf32>
    %2 = tpu.matmul %0, %1, %cst {dimension_numbers = #tpu.dot_dimension_numbers<[1], [0], [0], [1], [0, 0, 1, 1], [], []>} : vector<8x128xbf16>, vector<128x128xbf16>, vector<8x128xf32> -> vector<8x128xf32>
    %c0_3 = arith.constant 0 : index
    %c0_4 = arith.constant 0 : index
    %3 = vector.load %arg3[%c0_3, %c0_4] : memref<1x128xf32, #tpu.memory_space<vmem>>, vector<1x128xf32>
    %4 = vector.broadcast %3 : vector<1x128xf32> to vector<8x128xf32>
    %5 = arith.addf %2, %4 : vector<8x128xf32>
    %cst_5 = arith.constant 0.000000e+00 : f32
    %6 = vector.broadcast %cst_5 : f32 to vector<8x128xf32>
    %7 = arith.maximumf %5, %6 : vector<8x128xf32>
    %8 = arith.truncf %7 : vector<8x128xf32> to vector<8x128xbf16>
    %c0_6 = arith.constant 0 : index
    %c0_7 = arith.constant 0 : index
    %9 = vector.load %arg4[%c0_6, %c0_7] : memref<128x128xbf16, #tpu.memory_space<vmem>>, vector<128x128xbf16>
    %cst_8 = arith.constant dense<0.000000e+00> : vector<8x128xf32>
    %10 = tpu.matmul %8, %9, %cst_8 {dimension_numbers = #tpu.dot_dimension_numbers<[1], [0], [0], [1], [0, 0, 1, 1], [], []>} : vector<8x128xbf16>, vector<128x128xbf16>, vector<8x128xf32> -> vector<8x128xf32>
    %c0_9 = arith.constant 0 : index
    %c0_10 = arith.constant 0 : index
    %11 = vector.load %arg5[%c0_9, %c0_10] : memref<1x128xf32, #tpu.memory_space<vmem>>, vector<1x128xf32>
    %12 = vector.broadcast %11 : vector<1x128xf32> to vector<8x128xf32>
    %13 = arith.addf %10, %12 : vector<8x128xf32>
    %cst_11 = arith.constant 0.000000e+00 : f32
    %14 = vector.broadcast %cst_11 : f32 to vector<8x128xf32>
    %15 = arith.maximumf %13, %14 : vector<8x128xf32>
    %16 = arith.truncf %15 : vector<8x128xf32> to vector<8x128xbf16>
    %c0_12 = arith.constant 0 : index
    %c0_13 = arith.constant 0 : index
    %17 = vector.load %arg6[%c0_12, %c0_13] : memref<128x128xbf16, #tpu.memory_space<vmem>>, vector<128x128xbf16>
    %cst_14 = arith.constant dense<0.000000e+00> : vector<8x128xf32>
    %18 = tpu.matmul %16, %17, %cst_14 {dimension_numbers = #tpu.dot_dimension_numbers<[1], [0], [0], [1], [0, 0, 1, 1], [], []>} : vector<8x128xbf16>, vector<128x128xbf16>, vector<8x128xf32> -> vector<8x128xf32>
    %c0_15 = arith.constant 0 : index
    %c0_16 = arith.constant 0 : index
    %19 = vector.load %arg7[%c0_15, %c0_16] : memref<1x128xf32, #tpu.memory_space<vmem>>, vector<1x128xf32>
    %20 = vector.broadcast %19 : vector<1x128xf32> to vector<8x128xf32>
    %21 = arith.addf %18, %20 : vector<8x128xf32>
    %cst_17 = arith.constant dense<0xFF800000> : vector<8xf32>
    %22 = vector.multi_reduction <maximumf>, %21, %cst_17 [1] : vector<8x128xf32> to vector<8xf32>
    %23 = vector.shape_cast %22 : vector<8xf32> to vector<8x1xf32>
    %24 = vector.broadcast %23 : vector<8x1xf32> to vector<8x128xf32>
    %25 = arith.subf %21, %24 : vector<8x128xf32>
    %26 = math.exp %25 : vector<8x128xf32>
    %cst_18 = arith.constant dense<0.000000e+00> : vector<8xf32>
    %27 = vector.multi_reduction <add>, %26, %cst_18 [1] : vector<8x128xf32> to vector<8xf32>
    %28 = vector.shape_cast %27 : vector<8xf32> to vector<8x1xf32>
    %29 = math.log %28 : vector<8x1xf32>
    %30 = vector.broadcast %29 : vector<8x1xf32> to vector<8x128xf32>
    %31 = arith.subf %25, %30 : vector<8x128xf32>
    %c0_19 = arith.constant 0 : index
    %c0_20 = arith.constant 0 : index
    %32 = vector.load %arg8[%c0_19, %c0_20] : memref<8x128xf32, #tpu.memory_space<vmem>>, vector<8x128xf32>
    tpu.vector_store %arg8[%c0_19, %c0_20], %31 {strides = array<i32>} : memref<8x128xf32, #tpu.memory_space<vmem>>, vector<8x128xf32>,
    return
  }
  func.func @transform_0(%arg0: i32) -> (i32, i32) {
    %c0_i32 = arith.constant 0 : i32
    %c0_i32_0 = arith.constant 0 : i32
    return %arg0, %c0_i32 : i32, i32
  }
  func.func @transform_1(%arg0: i32) -> (i32, i32) {
    %c0_i32 = arith.constant 0 : i32
    %c0_i32_0 = arith.constant 0 : i32
    %c0_i32_1 = arith.constant 0 : i32
    return %c0_i32, %c0_i32_0 : i32, i32
  }
  func.func @transform_2(%arg0: i32) -> (i32, i32) {
    %c0_i32 = arith.constant 0 : i32
    %c0_i32_0 = arith.constant 0 : i32
    %c0_i32_1 = arith.constant 0 : i32
    return %c0_i32, %c0_i32_0 : i32, i32
  }
  func.func @transform_3(%arg0: i32) -> (i32, i32) {
    %c0_i32 = arith.constant 0 : i32
    %c0_i32_0 = arith.constant 0 : i32
    %c0_i32_1 = arith.constant 0 : i32
    return %c0_i32, %c0_i32_0 : i32, i32
  }
  func.func @transform_4(%arg0: i32) -> (i32, i32) {
    %c0_i32 = arith.constant 0 : i32
    %c0_i32_0 = arith.constant 0 : i32
    %c0_i32_1 = arith.constant 0 : i32
    return %c0_i32, %c0_i32_0 : i32, i32
  }
  func.func @transform_5(%arg0: i32) -> (i32, i32) {
    %c0_i32 = arith.constant 0 : i32
    %c0_i32_0 = arith.constant 0 : i32
    %c0_i32_1 = arith.constant 0 : i32
    return %c0_i32, %c0_i32_0 : i32, i32
  }
  func.func @transform_6(%arg0: i32) -> (i32, i32) {
    %c0_i32 = arith.constant 0 : i32
    %c0_i32_0 = arith.constant 0 : i32
    %c0_i32_1 = arith.constant 0 : i32
    return %c0_i32, %c0_i32_0 : i32, i32
  }
  func.func @transform_7(%arg0: i32) -> (i32, i32) {
    %c0_i32 = arith.constant 0 : i32
    %c0_i32_0 = arith.constant 0 : i32
    return %arg0, %c0_i32 : i32, i32
  }
}

</mosaic_0001>

<llo_original>
// kernel: actor_forward.1
$region0: #{actor_forward.1}
  #allocation0 [shape = 'u32[]', space=smem, size = 0x4, offset = 0x4, fixed_abs, tag = 'smem constant byte address 0x4 - core index']
  #allocation1 [shape = 'u32[144,128]{1,0:T(1,128)}', space=vmem, size = 0x12000, scoped, tag = 'internal scratch']
  %s0 = inlined_call_operand.vmem [shape: bf16[8,128], index: 0, kind: input, shape index: {}]
  %s1 = inlined_call_operand.hbm [shape: bf16[128,128], index: 1, kind: input, shape index: {}]
  %s2 = inlined_call_operand.vmem [shape: f32[1,128], index: 2, kind: input, shape index: {}]
  %s3 = inlined_call_operand.hbm [shape: bf16[128,128], index: 3, kind: input, shape index: {}]
  %s4 = inlined_call_operand.vmem [shape: f32[1,128], index: 4, kind: input, shape index: {}]
  %s5 = inlined_call_operand.hbm [shape: bf16[128,128], index: 5, kind: input, shape index: {}]
  %s6 = inlined_call_operand.vmem [shape: f32[1,128], index: 6, kind: input, shape index: {}]
  %s7 = inlined_call_operand.vmem [shape: f32[8,128], index: 7, kind: output, shape index: {}]
  %s8 = sld [smem:[#allocation0]]
  $region50: #{actor_forward.1} parent=0
    _
  %s10 = ssub.s32 1, %s8
  %s11 = scalar_select 0, %s10, %s8
  $region1: #{actor_forward.1} parent=0
    #allocation2 [shape = 'u8[32768]{0}', space=vmem, size = 0x8000, scoped, tag = 'input window, operand 1, single buffered']
    #allocation3 [shape = 's32[1]{0}', space=sflag, size = 0x4, scoped, tag = 'scoped memory for actor_forward.1']
    #allocation4 [shape = 'u8[32768]{0}', space=vmem, size = 0x8000, scoped, tag = 'input window, operand 3, single buffered']
    #allocation5 [shape = 's32[1]{0}', space=sflag, size = 0x4, scoped, tag = 'scoped memory for actor_forward.1']
    #allocation6 [shape = 'u8[32768]{0}', space=vmem, size = 0x8000, scoped, tag = 'input window, operand 5, single buffered']
    %12 = vsyncpa [#allocation3], 0
    %13 = vsyncpa [#allocation5], 0
    // Predicated region
    $region2: #{actor_forward.1} parent=1 // pred_check
      _
    $region3: #{actor_forward.1} parent=1 // pred_check_branch
      %15 = sbr.rel (0) target = $region5
    $region4: #{actor_forward.1} parent=1 // pred_region
      _
    $region5: #{actor_forward.1} parent=1 // pred_fallthru
      _
    // Predicated region
    $region6: #{actor_forward.1} parent=1 // pred_check
      _
    $region7: #{actor_forward.1} parent=1 // pred_check_branch
      %17 = sbr.rel (0) target = $region9
    $region8: #{actor_forward.1} parent=1 // pred_region
      %s19 = ssub.s32 1024, 1024
      %20 = vsyncadd [#allocation3], %s19
      %s21 = sshll.u32 [#allocation2], 4
      %s22 = int_to_ptr.vmem [resolvable:$true] %s21
      %27 = dma.hbm_to_vmem [thread:$0]  %s1, 1024, %s22, [#allocation3], 64, 64, 4
    $region9: #{actor_forward.1} parent=1 // pred_fallthru
      _
    // Predicated region
    $region10: #{actor_forward.1} parent=1 // pred_check
      _
    $region11: #{actor_forward.1} parent=1 // pred_check_branch
      %29 = sbr.rel (0) target = $region13
    $region12: #{actor_forward.1} parent=1 // pred_region
      _
    $region13: #{actor_forward.1} parent=1 // pred_fallthru
      _
    // Predicated region
    $region14: #{actor_forward.1} parent=1 // pred_check
      _
    $region15: #{actor_forward.1} parent=1 // pred_check_branch
      %31 = sbr.rel (0) target = $region17
    $region16: #{actor_forward.1} parent=1 // pred_region
      %s33 = ssub.s32 1024, 1024
      %34 = vsyncadd [#allocation5], %s33
      %s35 = sshll.u32 [#allocation4], 4
      %s36 = int_to_ptr.vmem [resolvable:$true] %s35
      %41 = dma.hbm_to_vmem [thread:$0]  %s3, 1024, %s36, [#allocation5], 64, 64, 4
    $region17: #{actor_forward.1} parent=1 // pred_fallthru
      _
    // Predicated region
    $region18: #{actor_forward.1} parent=1 // pred_check
      _
    $region19: #{actor_forward.1} parent=1 // pred_check_branch
      %43 = sbr.rel (0) target = $region21
    $region20: #{actor_forward.1} parent=1 // pred_region
      _
    $region21: #{actor_forward.1} parent=1 // pred_fallthru
      _
    // Predicated region
    $region22: #{actor_forward.1} parent=1 // pred_check
      _
    $region23: #{actor_forward.1} parent=1 // pred_check_branch
      %45 = sbr.rel (0) target = $region25
    $region24: #{actor_forward.1} parent=1 // pred_region
      %s47 = ssub.s32 1024, 1024
      %48 = vsyncadd [#allocation5], %s47
      %s49 = sshll.u32 [#allocation6], 4
      %s50 = int_to_ptr.vmem [resolvable:$true] %s49
      %55 = dma.hbm_to_vmem [thread:$0]  %s5, 1024, %s50, [#allocation5], 64, 64, 4
    $region25: #{actor_forward.1} parent=1 // pred_fallthru
      _
    // Predicated region
    $region26: #{actor_forward.1} parent=1 // pred_check
      _
    $region27: #{actor_forward.1} parent=1 // pred_check_branch
      %57 = sbr.rel (0) target = $region29
    $region28: #{actor_forward.1} parent=1 // pred_region
      _
    $region29: #{actor_forward.1} parent=1 // pred_fallthru
      _
    // Predicated region
    $region30: #{actor_forward.1} parent=1 // pred_check
      _
    $region31: #{actor_forward.1} parent=1 // pred_check_branch
      %59 = sbr.rel (0) target = $region33
    $region32: #{actor_forward.1} parent=1 // pred_region
      %60 = dma.done [#allocation3], 1024
    $region33: #{actor_forward.1} parent=1 // pred_fallthru
      _
    // Predicated region
    $region34: #{actor_forward.1} parent=1 // pred_check
      _
    $region35: #{actor_forward.1} parent=1 // pred_check_branch
      %62 = sbr.rel (0) target = $region37
    $region36: #{actor_forward.1} parent=1 // pred_region
      %63 = dma.done [#allocation5], 1024
    $region37: #{actor_forward.1} parent=1 // pred_fallthru
      _
    // Predicated region
    $region38: #{actor_forward.1} parent=1 // pred_check
      _
    $region39: #{actor_forward.1} parent=1 // pred_check_branch
      %65 = sbr.rel (0) target = $region41
    $region40: #{actor_forward.1} parent=1 // pred_region
      %66 = dma.done [#allocation5], 1024
    $region41: #{actor_forward.1} parent=1 // pred_fallthru
      _
    %v68 = vld [vmem:[%s0] sm:$0xf]
    %v69 = vld [vmem:[#allocation2] sm:$0xf]
    %v70 = vld [vmem:[#allocation2 + $0x4] sm:$0xf]
    %v71 = vld [vmem:[#allocation2 + $0x8] sm:$0xf]
    %v72 = vld [vmem:[#allocation2 + $0xc] sm:$0xf]
    %v73 = vld [vmem:[#allocation2 + $0x10] sm:$0xf]
    %v74 = vld [vmem:[#allocation2 + $0x14] sm:$0xf]
    %v75 = vld [vmem:[#allocation2 + $0x18] sm:$0xf]
    %v76 = vld [vmem:[#allocation2 + $0x1c] sm:$0xf]
    %v77 = vld [vmem:[#allocation2 + $0x20] sm:$0xf]
    %v78 = vld [vmem:[#allocation2 + $0x24] sm:$0xf]
    %v79 = vld [vmem:[#allocation2 + $0x28] sm:$0xf]
    %v80 = vld [vmem:[#allocation2 + $0x2c] sm:$0xf]
    %v81 = vld [vmem:[#allocation2 + $0x30] sm:$0xf]
    %v82 = vld [vmem:[#allocation2 + $0x34] sm:$0xf]
    %v83 = vld [vmem:[#allocation2 + $0x38] sm:$0xf]
    %v84 = vld [vmem:[#allocation2 + $0x3c] sm:$0xf]
    %v85 = vld [vmem:[%s2] sm:$0x1]
    %v87 = vlaneseq
    %v88 = vshrl.u32 %v87, 7
    %v89 = vsub.s32 0, %v88
    %v90 = vrot.slane %v85, %v89
    %v108 = vunpack.c.l.b16 %v69
    %v109 = vunpack.c.l.b16 %v70
    %v110 = vunpack.c.l.b16 %v71
    %v111 = vunpack.c.l.b16 %v72
    %v112 = vunpack.c.l.b16 %v73
    %v113 = vunpack.c.l.b16 %v74
    %v114 = vunpack.c.l.b16 %v75
    %v115 = vunpack.c.l.b16 %v76
    %v116 = vunpack.c.l.b16 %v77
    %v117 = vunpack.c.l.b16 %v78
    %v118 = vunpack.c.l.b16 %v79
    %v119 = vunpack.c.l.b16 %v80
    %v120 = vunpack.c.l.b16 %v81
    %v121 = vunpack.c.l.b16 %v82
    %v122 = vunpack.c.l.b16 %v83
    %v123 = vunpack.c.l.b16 %v84
    %v124 = vpack.c.b16 %v109, %v108
    %v125 = vpack.c.b16 %v111, %v110
    %v126 = vpack.c.b16 %v113, %v112
    %v127 = vpack.c.b16 %v115, %v114
    %v128 = vpack.c.b16 %v117, %v116
    %v129 = vpack.c.b16 %v119, %v118
    %v130 = vpack.c.b16 %v121, %v120
    %v131 = vpack.c.b16 %v123, %v122
    %140 = vmatprep.subr.bf16.mxu0 0
    %141 = vmatpush1.bf16.msra.mxu0 %v124
    %142 = vmatprep.subr.bf16.mxu0 0
    %143 = vmatpush1.bf16.msra.mxu0 %v125
    %144 = vmatprep.subr.bf16.mxu0 0
    %145 = vmatpush1.bf16.msra.mxu0 %v126
    %146 = vmatprep.subr.bf16.mxu0 0
    %147 = vmatpush1.bf16.msra.mxu0 %v127
    %148 = vmatprep.subr.bf16.mxu0 0
    %149 = vmatpush1.bf16.msra.mxu0 %v128
    %150 = vmatprep.subr.bf16.mxu0 0
    %151 = vmatpush1.bf16.msra.mxu0 %v129
    %152 = vmatprep.subr.bf16.mxu0 0
    %153 = vmatpush1.bf16.msra.mxu0 %v130
    %154 = vmatprep.subr.bf16.mxu0 0
    %155 = vmatpush1.bf16.msra.mxu0 %v131
    %156 = vmatprep.subr.bf16.mxu0 0
    %157 = vmatpush1.bf16.msra.mxu0 0
    %158 = vmatprep.subr.bf16.mxu0 0
    %159 = vmatpush1.bf16.msra.mxu0 0
    %160 = vmatprep.subr.bf16.mxu0 0
    %161 = vmatpush1.bf16.msra.mxu0 0
    %162 = vmatprep.subr.bf16.mxu0 0
    %163 = vmatpush1.bf16.msra.mxu0 0
    %164 = vmatprep.subr.bf16.mxu0 0
    %165 = vmatpush1.bf16.msra.mxu0 0
    %166 = vmatprep.subr.bf16.mxu0 0
    %167 = vmatpush1.bf16.msra.mxu0 0
    %168 = vmatprep.subr.bf16.mxu0 0
    %169 = vmatpush1.bf16.msra.mxu0 0
    %170 = vmatprep.subr.bf16.mxu0 0
    %171 = vmatpush1.bf16.msra.mxu0 0
    %172 = vmatprep.mubr.bf16.mxu0 0
    %173 = vmatmul.mubr.bf16.gmra.mrb[0].mxu0 %v68
    %v174 = vpop.f32.mrb[0].mxu0
    %v175 = vadd.f32 %v90, %v174
    %v176 = vpop.f32.mrb[0].mxu0
    %v177 = vpop.f32.mrb[0].mxu0
    %v178 = vpop.f32.mrb[0].mxu0
    %179 = vdwg.mxu0
    %v180 = vmax.f32 %v175, 0.0
    %v181 = vpack.c.bf16 %v180, %v180
    %v182 = vld [vmem:[#allocation4] sm:$0xf]
    %v183 = vld [vmem:[#allocation4 + $0x4] sm:$0xf]
    %v184 = vld [vmem:[#allocation4 + $0x8] sm:$0xf]
    %v185 = vld [vmem:[#allocation4 + $0xc] sm:$0xf]
    %v186 = vld [vmem:[#allocation4 + $0x10] sm:$0xf]
    %v187 = vld [vmem:[#allocation4 + $0x14] sm:$0xf]
    %v188 = vld [vmem:[#allocation4 + $0x18] sm:$0xf]
    %v189 = vld [vmem:[#allocation4 + $0x1c] sm:$0xf]
    %v190 = vld [vmem:[#allocation4 + $0x20] sm:$0xf]
    %v191 = vld [vmem:[#allocation4 + $0x24] sm:$0xf]
    %v192 = vld [vmem:[#allocation4 + $0x28] sm:$0xf]
    %v193 = vld [vmem:[#allocation4 + $0x2c] sm:$0xf]
    %v194 = vld [vmem:[#allocation4 + $0x30] sm:$0xf]
    %v195 = vld [vmem:[#allocation4 + $0x34] sm:$0xf]
    %v196 = vld [vmem:[#allocation4 + $0x38] sm:$0xf]
    %v197 = vld [vmem:[#allocation4 + $0x3c] sm:$0xf]
    %v198 = vld [vmem:[%s4] sm:$0x1]
    %v200 = vlaneseq
    %v201 = vshrl.u32 %v200, 7
    %v202 = vsub.s32 0, %v201
    %v203 = vrot.slane %v198, %v202
    %v221 = vunpack.c.l.b16 %v182
    %v222 = vunpack.c.l.b16 %v183
    %v223 = vunpack.c.l.b16 %v184
    %v224 = vunpack.c.l.b16 %v185
    %v225 = vunpack.c.l.b16 %v186
    %v226 = vunpack.c.l.b16 %v187
    %v227 = vunpack.c.l.b16 %v188
    %v228 = vunpack.c.l.b16 %v189
    %v229 = vunpack.c.l.b16 %v190
    %v230 = vunpack.c.l.b16 %v191
    %v231 = vunpack.c.l.b16 %v192
    %v232 = vunpack.c.l.b16 %v193
    %v233 = vunpack.c.l.b16 %v194
    %v234 = vunpack.c.l.b16 %v195
    %v235 = vunpack.c.l.b16 %v196
    %v236 = vunpack.c.l.b16 %v197
    %v237 = vpack.c.b16 %v222, %v221
    %v238 = vpack.c.b16 %v224, %v223
    %v239 = vpack.c.b16 %v226, %v225
    %v240 = vpack.c.b16 %v228, %v227
    %v241 = vpack.c.b16 %v230, %v229
    %v242 = vpack.c.b16 %v232, %v231
    %v243 = vpack.c.b16 %v234, %v233
    %v244 = vpack.c.b16 %v236, %v235
    %253 = vmatprep.subr.bf16.mxu0 0
    %254 = vmatpush1.bf16.msra.mxu0 %v237
    %255 = vmatprep.subr.bf16.mxu0 0
    %256 = vmatpush1.bf16.msra.mxu0 %v238
    %257 = vmatprep.subr.bf16.mxu0 0
    %258 = vmatpush1.bf16.msra.mxu0 %v239
    %259 = vmatprep.subr.bf16.mxu0 0
    %260 = vmatpush1.bf16.msra.mxu0 %v240
    %261 = vmatprep.subr.bf16.mxu0 0
    %262 = vmatpush1.bf16.msra.mxu0 %v241
    %263 = vmatprep.subr.bf16.mxu0 0
    %264 = vmatpush1.bf16.msra.mxu0 %v242
    %265 = vmatprep.subr.bf16.mxu0 0
    %266 = vmatpush1.bf16.msra.mxu0 %v243
    %267 = vmatprep.subr.bf16.mxu0 0
    %268 = vmatpush1.bf16.msra.mxu0 %v244
    %269 = vmatprep.subr.bf16.mxu0 0
    %270 = vmatpush1.bf16.msra.mxu0 0
    %271 = vmatprep.subr.bf16.mxu0 0
    %272 = vmatpush1.bf16.msra.mxu0 0
    %273 = vmatprep.subr.bf16.mxu0 0
    %274 = vmatpush1.bf16.msra.mxu0 0
    %275 = vmatprep.subr.bf16.mxu0 0
    %276 = vmatpush1.bf16.msra.mxu0 0
    %277 = vmatprep.subr.bf16.mxu0 0
    %278 = vmatpush1.bf16.msra.mxu0 0
    %279 = vmatprep.subr.bf16.mxu0 0
    %280 = vmatpush1.bf16.msra.mxu0 0
    %281 = vmatprep.subr.bf16.mxu0 0
    %282 = vmatpush1.bf16.msra.mxu0 0
    %283 = vmatprep.subr.bf16.mxu0 0
    %284 = vmatpush1.bf16.msra.mxu0 0
    %285 = vmatprep.mubr.bf16.mxu0 0
    %286 = vmatmul.mubr.bf16.gmra.mrb[0].mxu0 %v181
    %v287 = vpop.f32.mrb[0].mxu0
    %v288 = vadd.f32 %v203, %v287
    %v289 = vpop.f32.mrb[0].mxu0
    %v290 = vpop.f32.mrb[0].mxu0
    %v291 = vpop.f32.mrb[0].mxu0
    %292 = vdwg.mxu0
    %v293 = vmax.f32 %v288, 0.0
    %v294 = vpack.c.bf16 %v293, %v293
    %v295 = vld [vmem:[#allocation6] sm:$0xf]
    %v296 = vld [vmem:[#allocation6 + $0x4] sm:$0xf]
    %v297 = vld [vmem:[#allocation6 + $0x8] sm:$0xf]
    %v298 = vld [vmem:[#allocation6 + $0xc] sm:$0xf]
    %v299 = vld [vmem:[#allocation6 + $0x10] sm:$0xf]
    %v300 = vld [vmem:[#allocation6 + $0x14] sm:$0xf]
    %v301 = vld [vmem:[#allocation6 + $0x18] sm:$0xf]
    %v302 = vld [vmem:[#allocation6 + $0x1c] sm:$0xf]
    %v303 = vld [vmem:[#allocation6 + $0x20] sm:$0xf]
    %v304 = vld [vmem:[#allocation6 + $0x24] sm:$0xf]
    %v305 = vld [vmem:[#allocation6 + $0x28] sm:$0xf]
    %v306 = vld [vmem:[#allocation6 + $0x2c] sm:$0xf]
    %v307 = vld [vmem:[#allocation6 + $0x30] sm:$0xf]
    %v308 = vld [vmem:[#allocation6 + $0x34] sm:$0xf]
    %v309 = vld [vmem:[#allocation6 + $0x38] sm:$0xf]
    %v310 = vld [vmem:[#allocation6 + $0x3c] sm:$0xf]
    %v311 = vld [vmem:[%s6] sm:$0x1]
    %v313 = vlaneseq
    %v314 = vshrl.u32 %v313, 7
    %v315 = vsub.s32 0, %v314
    %v316 = vrot.slane %v311, %v315
    %v334 = vunpack.c.l.b16 %v295
    %v335 = vunpack.c.l.b16 %v296
    %v336 = vunpack.c.l.b16 %v297
    %v337 = vunpack.c.l.b16 %v298
    %v338 = vunpack.c.l.b16 %v299
    %v339 = vunpack.c.l.b16 %v300
    %v340 = vunpack.c.l.b16 %v301
    %v341 = vunpack.c.l.b16 %v302
    %v342 = vunpack.c.l.b16 %v303
    %v343 = vunpack.c.l.b16 %v304
    %v344 = vunpack.c.l.b16 %v305
    %v345 = vunpack.c.l.b16 %v306
    %v346 = vunpack.c.l.b16 %v307
    %v347 = vunpack.c.l.b16 %v308
    %v348 = vunpack.c.l.b16 %v309
    %v349 = vunpack.c.l.b16 %v310
    %v350 = vpack.c.b16 %v335, %v334
    %v351 = vpack.c.b16 %v337, %v336
    %v352 = vpack.c.b16 %v339, %v338
    %v353 = vpack.c.b16 %v341, %v340
    %v354 = vpack.c.b16 %v343, %v342
    %v355 = vpack.c.b16 %v345, %v344
    %v356 = vpack.c.b16 %v347, %v346
    %v357 = vpack.c.b16 %v349, %v348
    %366 = vmatprep.subr.bf16.mxu0 0
    %367 = vmatpush1.bf16.msra.mxu0 %v350
    %368 = vmatprep.subr.bf16.mxu0 0
    %369 = vmatpush1.bf16.msra.mxu0 %v351
    %370 = vmatprep.subr.bf16.mxu0 0
    %371 = vmatpush1.bf16.msra.mxu0 %v352
    %372 = vmatprep.subr.bf16.mxu0 0
    %373 = vmatpush1.bf16.msra.mxu0 %v353
    %374 = vmatprep.subr.bf16.mxu0 0
    %375 = vmatpush1.bf16.msra.mxu0 %v354
    %376 = vmatprep.subr.bf16.mxu0 0
    %377 = vmatpush1.bf16.msra.mxu0 %v355
    %378 = vmatprep.subr.bf16.mxu0 0
    %379 = vmatpush1.bf16.msra.mxu0 %v356
    %380 = vmatprep.subr.bf16.mxu0 0
    %381 = vmatpush1.bf16.msra.mxu0 %v357
    %382 = vmatprep.subr.bf16.mxu0 0
    %383 = vmatpush1.bf16.msra.mxu0 0
    %384 = vmatprep.subr.bf16.mxu0 0
    %385 = vmatpush1.bf16.msra.mxu0 0
    %386 = vmatprep.subr.bf16.mxu0 0
    %387 = vmatpush1.bf16.msra.mxu0 0
    %388 = vmatprep.subr.bf16.mxu0 0
    %389 = vmatpush1.bf16.msra.mxu0 0
    %390 = vmatprep.subr.bf16.mxu0 0
    %391 = vmatpush1.bf16.msra.mxu0 0
    %392 = vmatprep.subr.bf16.mxu0 0
    %393 = vmatpush1.bf16.msra.mxu0 0
    %394 = vmatprep.subr.bf16.mxu0 0
    %395 = vmatpush1.bf16.msra.mxu0 0
    %396 = vmatprep.subr.bf16.mxu0 0
    %397 = vmatpush1.bf16.msra.mxu0 0
    %398 = vmatprep.mubr.bf16.mxu0 0
    %399 = vmatmul.mubr.bf16.gmra.mrb[0].mxu0 %v294
    %v400 = vpop.f32.mrb[0].mxu0
    %v401 = vadd.f32 %v316, %v400
    %v402 = vpop.f32.mrb[0].mxu0
    %v403 = vpop.f32.mrb[0].mxu0
    %v404 = vpop.f32.mrb[0].mxu0
    %405 = vdwg.mxu0
    %406 = vmax.xlane.f32.xlu0 %v401
    %v407 = vpop.xlane.xlu0 %406
    %v408 = vsub.f32 %v401, %v407
    %v409 = vmul.f32 %v408, 1.442695
    %v410 = vpow.pop %v409
    %411 = vadd.xlane.f32.xlu0 %v410
    %v412 = vpop.xlane.xlu0 %411
    %v413 = vlog2.pop %v412
    %v414 = vmul.f32 %v413, 0.6931472
    %v415 = vsub.f32 %v408, %v414
    %416 = vst [vmem:[%s7] sm:$0xff] %v415
    // Predicated region
    $region42: #{actor_forward.1} parent=1 // pred_check
      _
    $region43: #{actor_forward.1} parent=1 // pred_check_branch
      %418 = sbr.rel (0) target = $region45
    $region44: #{actor_forward.1} parent=1 // pred_region
      _
    $region45: #{actor_forward.1} parent=1 // pred_fallthru
      _
    // Predicated region
    $region46: #{actor_forward.1} parent=1 // pred_check
      _
    $region47: #{actor_forward.1} parent=1 // pred_check_branch
      %420 = sbr.rel (0) target = $region49
    $region48: #{actor_forward.1} parent=1 // pred_region
      _
    $region49: #{actor_forward.1} parent=1 // pred_fallthru
      _
    %421 = vsyncpa [#allocation3], 1
    %422 = vsyncpa [#allocation5], 1

</llo_original>
